<compile_context>
chip_gen: v7x
topology: tpu7x:2x2x1
jax: 0.10.0
libtpu: 0.0.40
codegen_flags: <defaults>
</compile_context>

<pallas_src>
import functools

import jax
import jax.numpy as jnp
from jax import lax
from jax.experimental import pallas as pl
from jax.experimental.pallas import tpu as pltpu

_LANE = 128          # lane width
_CHUNK = 128         # sublane rows per inner-loop iteration (16 f32 vregs/value)
_MAX_TILE_ROWS = 4096  # 512K lanes per block (~29 MiB double-buffered, f32)


def _round_up(x, m):
    return ((x + m - 1) // m) * m


def _outconv_kernel(x_ref, w_ref, b_ref, o_ref):
    # x_ref: (nb, C_in, S, 128)  VMEM — spatial pixels dense on sublanes+lanes
    # w_ref: (C_out, C_in)       SMEM scalars
    # b_ref: (C_out,)            SMEM scalars
    # o_ref: (nb, C_out, S, 128) VMEM
    nb, c_in, s_rows, _ = x_ref.shape
    c_out = o_ref.shape[1]

    def process_rows(row0, nrows):
        # nb / channel loops are tiny & static; data-parallelism lives in the vreg.
        for n in range(nb):
            for o in range(c_out):
                acc = (x_ref[n, 0, pl.ds(row0, nrows), :].astype(jnp.float32)
                       * w_ref[o, 0])
                for c in range(1, c_in):
                    acc = acc + (x_ref[n, c, pl.ds(row0, nrows), :]
                                 .astype(jnp.float32) * w_ref[o, c])
                # Per-channel direct store: no concatenate, short live ranges.
                o_ref[n, o, pl.ds(row0, nrows), :] = (
                    acc + b_ref[o]).astype(o_ref.dtype)

    n_full = s_rows // _CHUNK
    rem = s_rows - n_full * _CHUNK

    if n_full > 0:            # static (block shape is compile-time)
        def body(i, carry):
            process_rows(pl.multiple_of(i * _CHUNK, _CHUNK), _CHUNK)
            return carry
        lax.fori_loop(0, n_full, body, 0)
    if rem > 0:               # static remainder (s_rows not a multiple of 128)
        process_rows(n_full * _CHUNK, rem)


@functools.partial(jax.jit, static_argnames=("max_tile_rows",))
def outconv_forward(x_nchw, weight, bias, max_tile_rows=_MAX_TILE_ROWS):
    """1x1 Conv2d forward, same semantics as nn.Conv2d(C_in, C_out, kernel_size=1).

    x_nchw : (N, C_in, H, W)
    weight : (C_out, C_in, 1, 1)   (PyTorch Conv2d layout)
    bias   : (C_out,)
    returns (N, C_out, H, W)
    """
    N, C_in, H, W = x_nchw.shape
    C_out = weight.shape[0]
    HW = H * W
    HW128 = _round_up(HW, _LANE)
    S_total = HW128 // _LANE            # sublane rows per image

    x_rows = x_nchw.reshape(N, C_in, HW)
    if HW128 != HW:
        # Only pads to the next multiple of 128 lanes (<=127 extra columns).
        x_rows = jnp.pad(x_rows, ((0, 0), (0, 0), (0, HW128 - HW)))
    x4 = x_rows.reshape(N, C_in, S_total, _LANE)

    w_mat = weight.reshape(C_out, C_in).astype(jnp.float32)
    b_vec = bias.astype(jnp.float32)

    # ---- static, shape-derived tile selection ---------------------------
    if S_total > max_tile_rows:
        s_tile = max_tile_rows          # multiple of 128 -> (8,128)-aligned
        nb = 1
    else:
        s_tile = S_total                # full spatial extent (always legal)
        # Batch several images per grid step when one image is small so the
        # per-step payload stays large enough to amortize pipeline overhead.
        nb = max(1, min(N, max_tile_rows // max(S_total, 1)))
        if N >= 2:
            nb = max(1, min(nb, N // 2))  # keep >=2 grid steps for v7x's 2 TCs
            while N % nb:                 # avoid ragged batch blocks
                nb -= 1
        elif S_total >= 16:
            # N == 1: split spatially so both v7x TensorCores get a block.
            s_tile = _round_up(pl.cdiv(S_total, 2), 8)
    grid = (pl.cdiv(N, nb), pl.cdiv(S_total, s_tile))

    itemsize = jnp.dtype(x_nchw.dtype).itemsize
    cost = pl.CostEstimate(
        flops=2 * N * HW128 * C_in * C_out,
        transcendentals=0,
        bytes_accessed=N * (C_in + C_out) * HW128 * itemsize
        + (w_mat.size + b_vec.size) * 4,
    )

    out4 = pl.pallas_call(
        _outconv_kernel,
        out_shape=jax.ShapeDtypeStruct((N, C_out, S_total, _LANE), x_nchw.dtype),
        grid_spec=pltpu.PrefetchScalarGridSpec(
            num_scalar_prefetch=0,
            grid=grid,
            in_specs=[
                # x block: nb images, all input channels, dense (rows, 128) tile.
                pl.BlockSpec((nb, C_in, s_tile, _LANE),
                             lambda b, t: (b, 0, t, 0)),
                # Weights / bias: tiny scalar tables resident in SMEM.
                pl.BlockSpec(memory_space=pltpu.MemorySpace.SMEM),
                pl.BlockSpec(memory_space=pltpu.MemorySpace.SMEM),
            ],
            out_specs=pl.BlockSpec((nb, C_out, s_tile, _LANE),
                                   lambda b, t: (b, 0, t, 0)),
        ),
        compiler_params=pltpu.CompilerParams(
            dimension_semantics=("parallel", "parallel"),
            vmem_limit_bytes=48 * 1024 * 1024,
        ),
        cost_estimate=cost,
    )(x4, w_mat, b_vec)

    if HW128 != HW:
        out = out4.reshape(N, C_out, HW128)[:, :, :HW]
    else:
        out = out4
    return out.reshape(N, C_out, H, W)


def _reference(x, weight, bias):
    c_out, c_in = weight.shape[0], weight.shape[1]
    return (jnp.einsum("nchw,oc->nohw", x, weight.reshape(c_out, c_in))
            + bias[None, :, None, None])


if __name__ == "__main__":
    in_channels, out_channels = 4, 3
    key = jax.random.PRNGKey(0)
    kx, kw, kb, kx2 = jax.random.split(key, 4)

    # PyTorch Conv2d default init: U(-bound, bound), bound = 1/sqrt(fan_in).
    bound = 1.0 / jnp.sqrt(float(in_channels))
    weight = jax.random.uniform(kw, (out_channels, in_channels, 1, 1),
                                minval=-bound, maxval=bound, dtype=jnp.float32)
    bias = jax.random.uniform(kb, (out_channels,),
                              minval=-bound, maxval=bound, dtype=jnp.float32)

    # Case 1: nominal small shape (lane-aligned H*W, multi-image blocking path).
    x1 = jax.random.normal(kx, (2, in_channels, 16, 16), dtype=jnp.float32)
    out1 = jax.block_until_ready(outconv_forward(x1, weight, bias))
    assert out1.shape == (2, out_channels, 16, 16)
    assert jnp.allclose(out1, _reference(x1, weight, bias), atol=1e-5, rtol=1e-5)

    # Case 2: H*W not a multiple of 128 (exercises the pad / masked-store path).
    x2 = jax.random.normal(kx2, (3, in_channels, 10, 10), dtype=jnp.float32)
    out2 = jax.block_until_ready(outconv_forward(x2, weight, bias))
    assert out2.shape == (3, out_channels, 10, 10)
    assert jnp.allclose(out2, _reference(x2, weight, bias), atol=1e-5, rtol=1e-5)

    print("KERNEL_OK")
</pallas_src>

<mosaic_0001>
module attributes {stable_mosaic.version = 11 : i64} {
  func.func @_outconv_kernel(%arg0: i32, %arg1: i32, %arg2: memref<1x4x2x128xf32, #tpu.memory_space<vmem>>, %arg3: memref<3x4xf32, #tpu.memory_space<smem>>, %arg4: memref<3xf32, #tpu.memory_space<smem>>, %arg5: memref<1x3x2x128xf32, #tpu.memory_space<vmem>>) attributes {dimension_semantics = [#tpu.dimension_semantics<parallel>, #tpu.dimension_semantics<parallel>], iteration_bounds = array<i64: 2, 1>, scalar_prefetch = 0 : i64, scratch_operands = 0 : i64, tpu.core_type = #tpu.core_type<tc>, window_params = [{transform_indices = @transform_0, window_bounds = array<i64: 1, 4, 2, 128>}, {transform_indices = @transform_1, window_bounds = array<i64: 3, 4>}, {transform_indices = @transform_2, window_bounds = array<i64: 3>}, {transform_indices = @transform_3, window_bounds = array<i64: 1, 3, 2, 128>}]} {
    %c0 = arith.constant 0 : index
    %c0_0 = arith.constant 0 : index
    %c0_1 = arith.constant 0 : index
    %c0_2 = arith.constant 0 : index
    %0 = vector.load %arg2[%c0, %c0_0, %c0_1, %c0_2] : memref<1x4x2x128xf32, #tpu.memory_space<vmem>>, vector<1x1x2x128xf32>
    %1 = vector.shape_cast %0 : vector<1x1x2x128xf32> to vector<2x128xf32>
    %c0_3 = arith.constant 0 : index
    %c0_4 = arith.constant 0 : index
    %2 = memref.load %arg3[%c0_3, %c0_4] : memref<3x4xf32, #tpu.memory_space<smem>>
    %3 = vector.broadcast %2 : f32 to vector<2x128xf32>
    %4 = arith.mulf %1, %3 : vector<2x128xf32>
    %c0_5 = arith.constant 0 : index
    %c1 = arith.constant 1 : index
    %c0_6 = arith.constant 0 : index
    %c0_7 = arith.constant 0 : index
    %5 = vector.load %arg2[%c0_5, %c1, %c0_6, %c0_7] : memref<1x4x2x128xf32, #tpu.memory_space<vmem>>, vector<1x1x2x128xf32>
    %6 = vector.shape_cast %5 : vector<1x1x2x128xf32> to vector<2x128xf32>
    %c0_8 = arith.constant 0 : index
    %c1_9 = arith.constant 1 : index
    %7 = memref.load %arg3[%c0_8, %c1_9] : memref<3x4xf32, #tpu.memory_space<smem>>
    %8 = vector.broadcast %7 : f32 to vector<2x128xf32>
    %9 = arith.mulf %6, %8 : vector<2x128xf32>
    %10 = arith.addf %4, %9 : vector<2x128xf32>
    %c0_10 = arith.constant 0 : index
    %c2 = arith.constant 2 : index
    %c0_11 = arith.constant 0 : index
    %c0_12 = arith.constant 0 : index
    %11 = vector.load %arg2[%c0_10, %c2, %c0_11, %c0_12] : memref<1x4x2x128xf32, #tpu.memory_space<vmem>>, vector<1x1x2x128xf32>
    %12 = vector.shape_cast %11 : vector<1x1x2x128xf32> to vector<2x128xf32>
    %c0_13 = arith.constant 0 : index
    %c2_14 = arith.constant 2 : index
    %13 = memref.load %arg3[%c0_13, %c2_14] : memref<3x4xf32, #tpu.memory_space<smem>>
    %14 = vector.broadcast %13 : f32 to vector<2x128xf32>
    %15 = arith.mulf %12, %14 : vector<2x128xf32>
    %16 = arith.addf %10, %15 : vector<2x128xf32>
    %c0_15 = arith.constant 0 : index
    %c3 = arith.constant 3 : index
    %c0_16 = arith.constant 0 : index
    %c0_17 = arith.constant 0 : index
    %17 = vector.load %arg2[%c0_15, %c3, %c0_16, %c0_17] : memref<1x4x2x128xf32, #tpu.memory_space<vmem>>, vector<1x1x2x128xf32>
    %18 = vector.shape_cast %17 : vector<1x1x2x128xf32> to vector<2x128xf32>
    %c0_18 = arith.constant 0 : index
    %c3_19 = arith.constant 3 : index
    %19 = memref.load %arg3[%c0_18, %c3_19] : memref<3x4xf32, #tpu.memory_space<smem>>
    %20 = vector.broadcast %19 : f32 to vector<2x128xf32>
    %21 = arith.mulf %18, %20 : vector<2x128xf32>
    %22 = arith.addf %16, %21 : vector<2x128xf32>
    %c0_20 = arith.constant 0 : index
    %23 = memref.load %arg4[%c0_20] : memref<3xf32, #tpu.memory_space<smem>>
    %24 = vector.broadcast %23 : f32 to vector<2x128xf32>
    %25 = arith.addf %22, %24 : vector<2x128xf32>
    %c0_21 = arith.constant 0 : index
    %c0_22 = arith.constant 0 : index
    %c0_23 = arith.constant 0 : index
    %c0_24 = arith.constant 0 : index
    %26 = vector.load %arg5[%c0_21, %c0_22, %c0_23, %c0_24] : memref<1x3x2x128xf32, #tpu.memory_space<vmem>>, vector<1x1x2x128xf32>
    %27 = vector.shape_cast %26 : vector<1x1x2x128xf32> to vector<2x128xf32>
    %28 = vector.shape_cast %25 : vector<2x128xf32> to vector<1x1x2x128xf32>
    tpu.vector_store %arg5[%c0_21, %c0_22, %c0_23, %c0_24], %28 {strides = array<i32>} : memref<1x3x2x128xf32, #tpu.memory_space<vmem>>, vector<1x1x2x128xf32>,
    %c0_25 = arith.constant 0 : index
    %c0_26 = arith.constant 0 : index
    %c0_27 = arith.constant 0 : index
    %c0_28 = arith.constant 0 : index
    %29 = vector.load %arg2[%c0_25, %c0_26, %c0_27, %c0_28] : memref<1x4x2x128xf32, #tpu.memory_space<vmem>>, vector<1x1x2x128xf32>
    %30 = vector.shape_cast %29 : vector<1x1x2x128xf32> to vector<2x128xf32>
    %c1_29 = arith.constant 1 : index
    %c0_30 = arith.constant 0 : index
    %31 = memref.load %arg3[%c1_29, %c0_30] : memref<3x4xf32, #tpu.memory_space<smem>>
    %32 = vector.broadcast %31 : f32 to vector<2x128xf32>
    %33 = arith.mulf %30, %32 : vector<2x128xf32>
    %c0_31 = arith.constant 0 : index
    %c1_32 = arith.constant 1 : index
    %c0_33 = arith.constant 0 : index
    %c0_34 = arith.constant 0 : index
    %34 = vector.load %arg2[%c0_31, %c1_32, %c0_33, %c0_34] : memref<1x4x2x128xf32, #tpu.memory_space<vmem>>, vector<1x1x2x128xf32>
    %35 = vector.shape_cast %34 : vector<1x1x2x128xf32> to vector<2x128xf32>
    %c1_35 = arith.constant 1 : index
    %c1_36 = arith.constant 1 : index
    %36 = memref.load %arg3[%c1_35, %c1_36] : memref<3x4xf32, #tpu.memory_space<smem>>
    %37 = vector.broadcast %36 : f32 to vector<2x128xf32>
    %38 = arith.mulf %35, %37 : vector<2x128xf32>
    %39 = arith.addf %33, %38 : vector<2x128xf32>
    %c0_37 = arith.constant 0 : index
    %c2_38 = arith.constant 2 : index
    %c0_39 = arith.constant 0 : index
    %c0_40 = arith.constant 0 : index
    %40 = vector.load %arg2[%c0_37, %c2_38, %c0_39, %c0_40] : memref<1x4x2x128xf32, #tpu.memory_space<vmem>>, vector<1x1x2x128xf32>
    %41 = vector.shape_cast %40 : vector<1x1x2x128xf32> to vector<2x128xf32>
    %c1_41 = arith.constant 1 : index
    %c2_42 = arith.constant 2 : index
    %42 = memref.load %arg3[%c1_41, %c2_42] : memref<3x4xf32, #tpu.memory_space<smem>>
    %43 = vector.broadcast %42 : f32 to vector<2x128xf32>
    %44 = arith.mulf %41, %43 : vector<2x128xf32>
    %45 = arith.addf %39, %44 : vector<2x128xf32>
    %c0_43 = arith.constant 0 : index
    %c3_44 = arith.constant 3 : index
    %c0_45 = arith.constant 0 : index
    %c0_46 = arith.constant 0 : index
    %46 = vector.load %arg2[%c0_43, %c3_44, %c0_45, %c0_46] : memref<1x4x2x128xf32, #tpu.memory_space<vmem>>, vector<1x1x2x128xf32>
    %47 = vector.shape_cast %46 : vector<1x1x2x128xf32> to vector<2x128xf32>
    %c1_47 = arith.constant 1 : index
    %c3_48 = arith.constant 3 : index
    %48 = memref.load %arg3[%c1_47, %c3_48] : memref<3x4xf32, #tpu.memory_space<smem>>
    %49 = vector.broadcast %48 : f32 to vector<2x128xf32>
    %50 = arith.mulf %47, %49 : vector<2x128xf32>
    %51 = arith.addf %45, %50 : vector<2x128xf32>
    %c1_49 = arith.constant 1 : index
    %52 = memref.load %arg4[%c1_49] : memref<3xf32, #tpu.memory_space<smem>>
    %53 = vector.broadcast %52 : f32 to vector<2x128xf32>
    %54 = arith.addf %51, %53 : vector<2x128xf32>
    %c0_50 = arith.constant 0 : index
    %c1_51 = arith.constant 1 : index
    %c0_52 = arith.constant 0 : index
    %c0_53 = arith.constant 0 : index
    %55 = vector.load %arg5[%c0_50, %c1_51, %c0_52, %c0_53] : memref<1x3x2x128xf32, #tpu.memory_space<vmem>>, vector<1x1x2x128xf32>
    %56 = vector.shape_cast %55 : vector<1x1x2x128xf32> to vector<2x128xf32>
    %57 = vector.shape_cast %54 : vector<2x128xf32> to vector<1x1x2x128xf32>
    tpu.vector_store %arg5[%c0_50, %c1_51, %c0_52, %c0_53], %57 {strides = array<i32>} : memref<1x3x2x128xf32, #tpu.memory_space<vmem>>, vector<1x1x2x128xf32>,
    %c0_54 = arith.constant 0 : index
    %c0_55 = arith.constant 0 : index
    %c0_56 = arith.constant 0 : index
    %c0_57 = arith.constant 0 : index
    %58 = vector.load %arg2[%c0_54, %c0_55, %c0_56, %c0_57] : memref<1x4x2x128xf32, #tpu.memory_space<vmem>>, vector<1x1x2x128xf32>
    %59 = vector.shape_cast %58 : vector<1x1x2x128xf32> to vector<2x128xf32>
    %c2_58 = arith.constant 2 : index
    %c0_59 = arith.constant 0 : index
    %60 = memref.load %arg3[%c2_58, %c0_59] : memref<3x4xf32, #tpu.memory_space<smem>>
    %61 = vector.broadcast %60 : f32 to vector<2x128xf32>
    %62 = arith.mulf %59, %61 : vector<2x128xf32>
    %c0_60 = arith.constant 0 : index
    %c1_61 = arith.constant 1 : index
    %c0_62 = arith.constant 0 : index
    %c0_63 = arith.constant 0 : index
    %63 = vector.load %arg2[%c0_60, %c1_61, %c0_62, %c0_63] : memref<1x4x2x128xf32, #tpu.memory_space<vmem>>, vector<1x1x2x128xf32>
    %64 = vector.shape_cast %63 : vector<1x1x2x128xf32> to vector<2x128xf32>
    %c2_64 = arith.constant 2 : index
    %c1_65 = arith.constant 1 : index
    %65 = memref.load %arg3[%c2_64, %c1_65] : memref<3x4xf32, #tpu.memory_space<smem>>
    %66 = vector.broadcast %65 : f32 to vector<2x128xf32>
    %67 = arith.mulf %64, %66 : vector<2x128xf32>
    %68 = arith.addf %62, %67 : vector<2x128xf32>
    %c0_66 = arith.constant 0 : index
    %c2_67 = arith.constant 2 : index
    %c0_68 = arith.constant 0 : index
    %c0_69 = arith.constant 0 : index
    %69 = vector.load %arg2[%c0_66, %c2_67, %c0_68, %c0_69] : memref<1x4x2x128xf32, #tpu.memory_space<vmem>>, vector<1x1x2x128xf32>
    %70 = vector.shape_cast %69 : vector<1x1x2x128xf32> to vector<2x128xf32>
    %c2_70 = arith.constant 2 : index
    %c2_71 = arith.constant 2 : index
    %71 = memref.load %arg3[%c2_70, %c2_71] : memref<3x4xf32, #tpu.memory_space<smem>>
    %72 = vector.broadcast %71 : f32 to vector<2x128xf32>
    %73 = arith.mulf %70, %72 : vector<2x128xf32>
    %74 = arith.addf %68, %73 : vector<2x128xf32>
    %c0_72 = arith.constant 0 : index
    %c3_73 = arith.constant 3 : index
    %c0_74 = arith.constant 0 : index
    %c0_75 = arith.constant 0 : index
    %75 = vector.load %arg2[%c0_72, %c3_73, %c0_74, %c0_75] : memref<1x4x2x128xf32, #tpu.memory_space<vmem>>, vector<1x1x2x128xf32>
    %76 = vector.shape_cast %75 : vector<1x1x2x128xf32> to vector<2x128xf32>
    %c2_76 = arith.constant 2 : index
    %c3_77 = arith.constant 3 : index
    %77 = memref.load %arg3[%c2_76, %c3_77] : memref<3x4xf32, #tpu.memory_space<smem>>
    %78 = vector.broadcast %77 : f32 to vector<2x128xf32>
    %79 = arith.mulf %76, %78 : vector<2x128xf32>
    %80 = arith.addf %74, %79 : vector<2x128xf32>
    %c2_78 = arith.constant 2 : index
    %81 = memref.load %arg4[%c2_78] : memref<3xf32, #tpu.memory_space<smem>>
    %82 = vector.broadcast %81 : f32 to vector<2x128xf32>
    %83 = arith.addf %80, %82 : vector<2x128xf32>
    %c0_79 = arith.constant 0 : index
    %c2_80 = arith.constant 2 : index
    %c0_81 = arith.constant 0 : index
    %c0_82 = arith.constant 0 : index
    %84 = vector.load %arg5[%c0_79, %c2_80, %c0_81, %c0_82] : memref<1x3x2x128xf32, #tpu.memory_space<vmem>>, vector<1x1x2x128xf32>
    %85 = vector.shape_cast %84 : vector<1x1x2x128xf32> to vector<2x128xf32>
    %86 = vector.shape_cast %83 : vector<2x128xf32> to vector<1x1x2x128xf32>
    tpu.vector_store %arg5[%c0_79, %c2_80, %c0_81, %c0_82], %86 {strides = array<i32>} : memref<1x3x2x128xf32, #tpu.memory_space<vmem>>, vector<1x1x2x128xf32>,
    return
  }
  func.func @transform_0(%arg0: i32, %arg1: i32) -> (i32, i32, i32, i32) {
    %c0_i32 = arith.constant 0 : i32
    %c0_i32_0 = arith.constant 0 : i32
    %c0_i32_1 = arith.constant 0 : i32
    return %arg0, %c0_i32, %arg1, %c0_i32_0 : i32, i32, i32, i32
  }
  func.func @transform_1(%arg0: i32, %arg1: i32) -> (i32, i32) {
    %c0_i32 = arith.constant 0 : i32
    %c0_i32_0 = arith.constant 0 : i32
    %c0_i32_1 = arith.constant 0 : i32
    return %c0_i32, %c0_i32_0 : i32, i32
  }
  func.func @transform_2(%arg0: i32, %arg1: i32) -> i32 {
    %c0_i32 = arith.constant 0 : i32
    %c0_i32_0 = arith.constant 0 : i32
    return %c0_i32 : i32
  }
  func.func @transform_3(%arg0: i32, %arg1: i32) -> (i32, i32, i32, i32) {
    %c0_i32 = arith.constant 0 : i32
    %c0_i32_0 = arith.constant 0 : i32
    %c0_i32_1 = arith.constant 0 : i32
    return %arg0, %c0_i32, %arg1, %c0_i32_0 : i32, i32, i32, i32
  }
}

</mosaic_0001>

<llo_original>
// kernel: outconv_forward.1
$region0: #{outconv_forward.1}
  #allocation0 [shape = 'u32[]', space=smem, size = 0x4, offset = 0x4, fixed_abs, tag = 'smem constant byte address 0x4 - core index']
  #allocation1 [shape = 'u32[144,128]{1,0:T(1,128)}', space=vmem, size = 0x12000, scoped, tag = 'internal scratch']
  %s0 = inlined_call_operand.vmem [shape: f32[2,4,2,128], index: 0, kind: input, shape index: {}]
  %s1 = inlined_call_operand.vmem [shape: f32[3,4], index: 1, kind: input, shape index: {}]
  %s2 = inlined_call_operand.vmem [shape: f32[3], index: 2, kind: input, shape index: {}]
  %s3 = inlined_call_operand.vmem [shape: f32[2,3,2,128], index: 3, kind: output, shape index: {}]
  %s4 = sld [smem:[#allocation0]]
  $region53: #{outconv_forward.1} parent=0
    _
  %s6 = ssub.s32 1, %s4
  %s7 = scalar_select 0, %s6, %s4
  $region1: #{outconv_forward.1} parent=0
    #allocation2 [shape = 'u8[2048]{0}', space=smem, size = 0x800, scoped, tag = 'input window, operand 1, single buffered']
    #allocation3 [shape = 's32[2]{0}', space=sflag, size = 0x8, scoped, tag = 'scoped memory for outconv_forward.1']
    #allocation4 [shape = 'u8[512]{0}', space=smem, size = 0x200, scoped, tag = 'input window, operand 2, single buffered']
    #allocation5 [shape = 's32[1]{0}', space=sflag, size = 0x4, scoped, tag = 'scoped memory for outconv_forward.1']
    %8 = vsyncpa [#allocation3], 0
    %9 = vsyncpa [#allocation5], 0
    loop: start=0, step=1, limit=4
    $region2: #{outconv_forward.1} parent=1 // loop_pre_header
      _
    $region3: #{outconv_forward.1} parent=1 // loop_header
      %s11 = sphi 0, %s15
      %p12 = scmp.ge.s32.totalorder %s11, 4
      %s18 = sphi 0, %s30
      %s19 = sphi 0, %s26
      %s20 = sphi 0, %s18
      %s21 = sphi 0, %s19
      %s22 = sphi 0, %s20
      %s23 = sphi 0, %s21
      %s35 = sphi 0, %s37
      %s38 = sphi 0, %s35
      %s39 = sphi 0, %s38
      %s55 = sphi 0, %s39
      %s59 = sphi 0, %s59
      %s61 = sphi 0, %s59
      %s62 = sphi 0, %s61
      %s76 = sphi 0, %s62
      %s80 = sphi 0, %s80
      %s82 = sphi 0, %s80
      %s83 = sphi 0, %s82
      %s97 = sphi 0, %s83
      %s105 = sphi 0, %s107
      %s108 = sphi 0, %s105
      %s109 = sphi 0, %s108
      %s125 = sphi 0, %s109
    $region4: #{outconv_forward.1} parent=1 // loop_header_branch
      %14 = sbr.rel (%p12) target = $region8
    $region5: #{outconv_forward.1} parent=1 // loop_body
      %s16 = ssub.s32 %s11, 1
      %s17 = ssub.s32 %s11, 2
      %s24 = sadd.s32 1, %s19
      %p25 = scmp.ge.s32.totalorder %s24, 1
      %s26 = scalar_select %p25, 0, %s24
      %s27 = sadd.s32 1, %s18
      %s28 = scalar_select %p25, %s27, %s18
      %p29 = scmp.ge.s32.totalorder %s28, 2
      %s30 = scalar_select %p29, 0, %s28
      %s31 = ssub.s32 %s18, %s30
      %s32 = ssub.s32 %s19, %s26
      %s33 = sor.u32 %s31, %s32
      %p34 = scmp.eq.s32.totalorder %s33, 0
      %s36 = sadd.s32 %s35, 1
      %s37 = scalar_select %p34, %s35, %s36
      %p40 = pneg %p34
      %p41 = scmp.eq.s32.totalorder %s11, 1
      %p42 = por %p40, %p41
      %p43 = scmp.ne.s32.totalorder %s35, %s38
      %p44 = scmp.eq.s32.totalorder %s11, 0
      %p45 = por %p43, %p44
      %p46 = scmp.ne.s32.totalorder %s35, %s38
      %p47 = scmp.eq.s32.totalorder %s16, 1
      %p48 = por %p46, %p47
      %p49 = scmp.ne.s32.totalorder %s38, %s39
      %p50 = scmp.eq.s32.totalorder %s16, 0
      %p51 = por %p49, %p50
      %p52 = scmp.ne.s32.totalorder %s38, %s39
      %p53 = scmp.eq.s32.totalorder %s17, 1
      %p54 = por %p52, %p53
      %p56 = scmp.ne.s32.totalorder %s39, %s55
      %p57 = scmp.eq.s32.totalorder %s17, 0
      %p58 = por %p56, %p57
      %s60 = sadd.s32 %s59, 1
      %p63 = scmp.eq.s32.totalorder %s11, 1
      %p64 = scmp.ne.s32.totalorder %s59, %s61
      %p65 = scmp.eq.s32.totalorder %s11, 0
      %p66 = por %p64, %p65
      %p67 = scmp.ne.s32.totalorder %s59, %s61
      %p68 = scmp.eq.s32.totalorder %s16, 1
      %p69 = por %p67, %p68
      %p70 = scmp.ne.s32.totalorder %s61, %s62
      %p71 = scmp.eq.s32.totalorder %s16, 0
      %p72 = por %p70, %p71
      %p73 = scmp.ne.s32.totalorder %s61, %s62
      %p74 = scmp.eq.s32.totalorder %s17, 1
      %p75 = por %p73, %p74
      %p77 = scmp.ne.s32.totalorder %s62, %s76
      %p78 = scmp.eq.s32.totalorder %s17, 0
      %p79 = por %p77, %p78
      %s81 = sadd.s32 %s80, 1
      %p84 = scmp.eq.s32.totalorder %s11, 1
      %p85 = scmp.ne.s32.totalorder %s80, %s82
      %p86 = scmp.eq.s32.totalorder %s11, 0
      %p87 = por %p85, %p86
      %p88 = scmp.ne.s32.totalorder %s80, %s82
      %p89 = scmp.eq.s32.totalorder %s16, 1
      %p90 = por %p88, %p89
      %p91 = scmp.ne.s32.totalorder %s82, %s83
      %p92 = scmp.eq.s32.totalorder %s16, 0
      %p93 = por %p91, %p92
      %p94 = scmp.ne.s32.totalorder %s82, %s83
      %p95 = scmp.eq.s32.totalorder %s17, 1
      %p96 = por %p94, %p95
      %p98 = scmp.ne.s32.totalorder %s83, %s97
      %p99 = scmp.eq.s32.totalorder %s17, 0
      %p100 = por %p98, %p99
      %s101 = ssub.s32 %s18, %s30
      %s102 = ssub.s32 %s19, %s26
      %s103 = sor.u32 %s101, %s102
      %p104 = scmp.eq.s32.totalorder %s103, 0
      %s106 = sadd.s32 %s105, 1
      %s107 = scalar_select %p104, %s105, %s106
      %p110 = pneg %p104
      %p111 = scmp.eq.s32.totalorder %s11, 1
      %p112 = por %p110, %p111
      %p113 = scmp.ne.s32.totalorder %s105, %s108
      %p114 = scmp.eq.s32.totalorder %s11, 0
      %p115 = por %p113, %p114
      %p116 = scmp.ne.s32.totalorder %s105, %s108
      %p117 = scmp.eq.s32.totalorder %s16, 1
      %p118 = por %p116, %p117
      %p119 = scmp.ne.s32.totalorder %s108, %s109
      %p120 = scmp.eq.s32.totalorder %s16, 0
      %p121 = por %p119, %p120
      %p122 = scmp.ne.s32.totalorder %s108, %s109
      %p123 = scmp.eq.s32.totalorder %s17, 1
      %p124 = por %p122, %p123
      %p126 = scmp.ne.s32.totalorder %s109, %s125
      %p127 = scmp.eq.s32.totalorder %s17, 0
      %p128 = por %p126, %p127
      %p129 = scmp.le.s32.totalorder 1, %s11
      %p130 = scmp.lt.s32.totalorder %s11, 3
      %p131 = pnand %p129, %p130
      %p132 = pneg %p131
      // Predicated region
      $region9: #{outconv_forward.1} parent=5 // pred_check
        _
      $region10: #{outconv_forward.1} parent=5 // pred_check_branch
        %134 = sbr.rel (%p131) target = $region12
      $region11: #{outconv_forward.1} parent=5 // pred_region
        %s135 = ssub.s32 %s11, 1
        // Predicated region
        $region13: #{outconv_forward.1} parent=11 // pred_check
          %p136 = pneg %p72
        $region14: #{outconv_forward.1} parent=11 // pred_check_branch
          %138 = sbr.rel (%p136) target = $region16
        $region15: #{outconv_forward.1} parent=11 // pred_region
          %s140 = ssub.s32 64, 64
          %141 = vsyncadd [#allocation3], %s140
          %s143 = sshll.u32 %s1, 4
          %s144 = int_to_ptr.vmem [resolvable:$true] %s143
          %146 = dma.vmem_to_smem %s144, 64, [#allocation2], [#allocation3]
        $region16: #{outconv_forward.1} parent=11 // pred_fallthru
          _
        // Predicated region
        $region17: #{outconv_forward.1} parent=11 // pred_check
          %p147 = pneg %p93
        $region18: #{outconv_forward.1} parent=11 // pred_check_branch
          %149 = sbr.rel (%p147) target = $region20
        $region19: #{outconv_forward.1} parent=11 // pred_region
          %s151 = ssub.s32 16, 16
          %152 = vsyncadd [#allocation5], %s151
          %s154 = sshll.u32 %s2, 4
          %s155 = int_to_ptr.vmem [resolvable:$true] %s154
          %157 = dma.vmem_to_smem %s155, 16, [#allocation4], [#allocation5]
        $region20: #{outconv_forward.1} parent=11 // pred_fallthru
          _
      $region12: #{outconv_forward.1} parent=5 // pred_fallthru
        _
      %p158 = scmp.lt.s32.totalorder %s11, 2
      // Predicated region
      $region21: #{outconv_forward.1} parent=5 // pred_check
        %p159 = pneg %p158
      $region22: #{outconv_forward.1} parent=5 // pred_check_branch
        %161 = sbr.rel (%p159) target = $region24
      $region23: #{outconv_forward.1} parent=5 // pred_region
        // Predicated region
        $region25: #{outconv_forward.1} parent=23 // pred_check
          %p162 = pneg %p45
        $region26: #{outconv_forward.1} parent=23 // pred_check_branch
          %164 = sbr.rel (%p162) target = $region28
        $region27: #{outconv_forward.1} parent=23 // pred_region
          %p165 = scmp.lt.s32.totalorder %s18, 1
          %s166 = scalar_select %p165, %s18, 1
          %p167 = scmp.lt.s32.totalorder %s19, 0
          %s168 = scalar_select %p167, %s19, 0
          %s169 = smul.addr %s166, 4
          %s170 = sadd.s32 %s168, %s169
          %s171 = smul.addr %s170, 2
          %s172 = scalar_lea.vmem %s0, %s171
        $region28: #{outconv_forward.1} parent=23 // pred_fallthru
          _
      $region24: #{outconv_forward.1} parent=5 // pred_fallthru
        _
      %p173 = scmp.le.s32.totalorder 1, %s11
      %p174 = scmp.lt.s32.totalorder %s11, 3
      %p175 = pnand %p173, %p174
      %p176 = pneg %p175
      // Predicated region
      $region29: #{outconv_forward.1} parent=5 // pred_check
        _
      $region30: #{outconv_forward.1} parent=5 // pred_check_branch
        %178 = sbr.rel (%p175) target = $region32
      $region31: #{outconv_forward.1} parent=5 // pred_region
        %s179 = ssub.s32 %s11, 1
        // Predicated region
        $region33: #{outconv_forward.1} parent=31 // pred_check
          %p180 = pneg %p72
        $region34: #{outconv_forward.1} parent=31 // pred_check_branch
          %182 = sbr.rel (%p180) target = $region36
        $region35: #{outconv_forward.1} parent=31 // pred_region
          %183 = dma.done [#allocation3], 64
        $region36: #{outconv_forward.1} parent=31 // pred_fallthru
          _
        // Predicated region
        $region37: #{outconv_forward.1} parent=31 // pred_check
          %p184 = pneg %p93
        $region38: #{outconv_forward.1} parent=31 // pred_check_branch
          %186 = sbr.rel (%p184) target = $region40
        $region39: #{outconv_forward.1} parent=31 // pred_region
          %187 = dma.done [#allocation5], 16
        $region40: #{outconv_forward.1} parent=31 // pred_fallthru
          _
        %188 = sfence
        %p189 = scmp.lt.s32.totalorder %s20, 1
        %s190 = scalar_select %p189, %s20, 1
        %p191 = scmp.lt.s32.totalorder %s21, 0
        %s192 = scalar_select %p191, %s21, 0
        %s193 = smul.addr %s190, 4
        %s194 = sadd.s32 %s192, %s193
        %s195 = smul.addr %s194, 2
        %s196 = scalar_lea.vmem %s0, %s195
        %p197 = pneg %p51
        %p198 = pneg %p48
        %p199 = pneg %p72
        %p200 = pneg %p69
        %p201 = pneg %p93
        %p202 = pneg %p90
        %p203 = pneg %p121
        %p204 = pneg %p118
        %p205 = scmp.lt.s32.totalorder %s20, 1
        %s206 = scalar_select %p205, %s20, 1
        %p207 = scmp.lt.s32.totalorder %s21, 0
        %s208 = scalar_select %p207, %s21, 0
        %s209 = smul.addr %s206, 3
        %s210 = sadd.s32 %s208, %s209
        %s211 = smul.addr %s210, 2
        %s212 = scalar_lea.vmem %s3, %s211
        %p213 = scmp.lt.s32.totalorder %s20, 1
        %s214 = scalar_select %p213, %s20, 1
        %p215 = scmp.lt.s32.totalorder %s21, 0
        %s216 = scalar_select %p215, %s21, 0
        %s217 = smul.addr %s214, 4
        %s218 = sadd.s32 %s216, %s217
        %s219 = smul.addr %s218, 2
        %s220 = scalar_lea.vmem %s0, %s219
        %p221 = scmp.lt.s32.totalorder %s20, 1
        %s222 = scalar_select %p221, %s20, 1
        %p223 = scmp.lt.s32.totalorder %s21, 0
        %s224 = scalar_select %p223, %s21, 0
        %s225 = smul.addr %s222, 3
        %s226 = sadd.s32 %s224, %s225
        %s227 = smul.addr %s226, 2
        %s228 = scalar_lea.vmem %s3, %s227
        %v229 = vld [vmem:[%s220] sm:$0x3]
        %s230 = sld [smem:[#allocation2]]
        %v231 = vstv %s230
        %v232 = vmul.f32 %v229, %v231
        %s233 = scalar_lea.vmem %s220, 2
        %v234 = vld [vmem:[%s233] sm:$0x3]
        %s235 = sld [smem:[#allocation2 + $0x1]]
        %v236 = vstv %s235
        %v237 = vmul.f32 %v234, %v236
        %v238 = vadd.f32 %v232, %v237
        %s239 = scalar_lea.vmem %s220, 4
        %v240 = vld [vmem:[%s239] sm:$0x3]
        %s241 = sld [smem:[#allocation2 + $0x2]]
        %v242 = vstv %s241
        %v243 = vmul.f32 %v240, %v242
        %v244 = vadd.f32 %v238, %v243
        %s245 = scalar_lea.vmem %s220, 6
        %v246 = vld [vmem:[%s245] sm:$0x3]
        %s247 = sld [smem:[#allocation2 + $0x3]]
        %v248 = vstv %s247
        %v249 = vmul.f32 %v246, %v248
        %v250 = vadd.f32 %v244, %v249
        %s251 = sld [smem:[#allocation4]]
        %v252 = vstv %s251
        %v253 = vadd.f32 %v250, %v252
        %254 = vst [vmem:[%s228] sm:$0x3] %v253
        %v255 = vld [vmem:[%s220] sm:$0x3]
        %s256 = sld [smem:[#allocation2 + $0x80]]
        %v257 = vstv %s256
        %v258 = vmul.f32 %v255, %v257
        %v259 = vld [vmem:[%s233] sm:$0x3]
        %s260 = sld [smem:[#allocation2 + $0x81]]
        %v261 = vstv %s260
        %v262 = vmul.f32 %v259, %v261
        %v263 = vadd.f32 %v258, %v262
        %v264 = vld [vmem:[%s239] sm:$0x3]
        %s265 = sld [smem:[#allocation2 + $0x82]]
        %v266 = vstv %s265
        %v267 = vmul.f32 %v264, %v266
        %v268 = vadd.f32 %v263, %v267
        %v269 = vld [vmem:[%s245] sm:$0x3]
        %s270 = sld [smem:[#allocation2 + $0x83]]
        %v271 = vstv %s270
        %v272 = vmul.f32 %v269, %v271
        %v273 = vadd.f32 %v268, %v272
        %s274 = sld [smem:[#allocation4 + $0x1]]
        %v275 = vstv %s274
        %v276 = vadd.f32 %v273, %v275
        %s277 = scalar_lea.vmem %s228, 2
        %278 = vst [vmem:[%s277] sm:$0x3] %v276
        %v279 = vld [vmem:[%s220] sm:$0x3]
        %s280 = sld [smem:[#allocation2 + $0x100]]
        %v281 = vstv %s280
        %v282 = vmul.f32 %v279, %v281
        %v283 = vld [vmem:[%s233] sm:$0x3]
        %s284 = sld [smem:[#allocation2 + $0x101]]
        %v285 = vstv %s284
        %v286 = vmul.f32 %v283, %v285
        %v287 = vadd.f32 %v282, %v286
        %v288 = vld [vmem:[%s239] sm:$0x3]
        %s289 = sld [smem:[#allocation2 + $0x102]]
        %v290 = vstv %s289
        %v291 = vmul.f32 %v288, %v290
        %v292 = vadd.f32 %v287, %v291
        %v293 = vld [vmem:[%s245] sm:$0x3]
        %s294 = sld [smem:[#allocation2 + $0x103]]
        %v295 = vstv %s294
        %v296 = vmul.f32 %v293, %v295
        %v297 = vadd.f32 %v292, %v296
        %s298 = sld [smem:[#allocation4 + $0x2]]
        %v299 = vstv %s298
        %v300 = vadd.f32 %v297, %v299
        %s301 = scalar_lea.vmem %s228, 4
        %302 = vst [vmem:[%s301] sm:$0x3] %v300
        %p303 = scmp.lt.s32.totalorder %s20, 1
        %s304 = scalar_select %p303, %s20, 1
        %p305 = scmp.lt.s32.totalorder %s21, 0
        %s306 = scalar_select %p305, %s21, 0
        %s307 = smul.addr %s304, 3
        %s308 = sadd.s32 %s306, %s307
        %s309 = smul.addr %s308, 2
        %s310 = scalar_lea.vmem %s3, %s309
        // Predicated region
        $region41: #{outconv_forward.1} parent=31 // pred_check
          %p311 = pneg %p118
        $region42: #{outconv_forward.1} parent=31 // pred_check_branch
          %313 = sbr.rel (%p311) target = $region44
        $region43: #{outconv_forward.1} parent=31 // pred_region
          _
        $region44: #{outconv_forward.1} parent=31 // pred_fallthru
          _
      $region32: #{outconv_forward.1} parent=5 // pred_fallthru
        _
      %p314 = scmp.le.s32.totalorder 2, %s11
      // Predicated region
      $region45: #{outconv_forward.1} parent=5 // pred_check
        %p315 = pneg %p314
      $region46: #{outconv_forward.1} parent=5 // pred_check_branch
        %317 = sbr.rel (%p315) target = $region48
      $region47: #{outconv_forward.1} parent=5 // pred_region
        %s318 = ssub.s32 %s11, 2
        // Predicated region
        $region49: #{outconv_forward.1} parent=47 // pred_check
          %p319 = pneg %p124
        $region50: #{outconv_forward.1} parent=47 // pred_check_branch
          %321 = sbr.rel (%p319) target = $region52
        $region51: #{outconv_forward.1} parent=47 // pred_region
          %p322 = scmp.lt.s32.totalorder %s22, 1
          %s323 = scalar_select %p322, %s22, 1
          %p324 = scmp.lt.s32.totalorder %s23, 0
          %s325 = scalar_select %p324, %s23, 0
          %s326 = smul.addr %s323, 3
          %s327 = sadd.s32 %s325, %s326
          %s328 = smul.addr %s327, 2
          %s329 = scalar_lea.vmem %s3, %s328
        $region52: #{outconv_forward.1} parent=47 // pred_fallthru
          _
      $region48: #{outconv_forward.1} parent=5 // pred_fallthru
        _
    $region6: #{outconv_forward.1} parent=1 // loop_footer
      %s15 = sadd.s32 1, %s11
    $region7: #{outconv_forward.1} parent=1 // loop_footer_branch
      %10 = sbr.rel target = $region3
    $region8: #{outconv_forward.1} parent=1 // loop_exit
      _
    %330 = vsyncpa [#allocation3], 1
    %s331 = scalar_lea.sflag [#allocation3], 1
    %332 = vsyncpa %s331, 1
    %333 = vsyncpa [#allocation5], 1

</llo_original>
